<compile_context>
chip_gen: v6e
topology: v6e:2x2x1
jax: 0.10.0
libtpu: 0.0.40
codegen_flags: <defaults>
</compile_context>

<pallas_src>
import functools

import jax
import jax.numpy as jnp
from jax.experimental import pallas as pl
from jax.experimental.pallas import tpu as pltpu

HIDDEN = 512
H_CHUNK = 128        # lane width of one hidden-dim chunk (1 vreg wide)
SUB_ROWS = 128       # rows processed per in-kernel sub-block
MXU_MIN_ROWS = 128   # use the MXU for layer 1 when a sub-block has >= this many rows


def _round_up(x, m):
    return ((x + m - 1) // m) * m


def _mlp_kernel(x_ref, w1_ref, b1_ref, w2_ref, b2_ref, o_ref, *,
                sub_rows=SUB_ROWS, mxu_min_rows=MXU_MIN_ROWS):
    # x_ref : (TB, Dp)  VMEM   observation rows (features/rows zero-padded)
    # w1_ref: (Dp, H)   VMEM   layer-1 weight in (in, out) layout, rows padded to 8
    # b1_ref: (1, H)    VMEM
    # w2_ref: (1, H)    VMEM   layer-2 weight stored as a dense row vector
    # b2_ref: (1, 1)    SMEM   scalar bias
    # o_ref : (TB, 1)   VMEM
    tb = x_ref.shape[0]
    dp, h_dim = w1_ref.shape
    n_chunks = h_dim // H_CHUNK
    b2 = b2_ref[0, 0]

    # Static Python loop over row sub-blocks keeps the live activation chunk
    # bounded at (sub_rows, H_CHUNK) regardless of the grid tile size.
    r0 = 0
    while r0 < tb:
        rs = min(sub_rows, tb - r0)
        x_blk = x_ref[r0:r0 + rs, :]                      # (rs, Dp)

        # Running (rs, H_CHUNK) partial of h * w2 -> single XLU reduce at the end.
        partial = jnp.zeros((rs, H_CHUNK), jnp.float32)

        for c in range(n_chunks):                         # 4 chunks, static
            lo = c * H_CHUNK
            w1c = w1_ref[:, lo:lo + H_CHUNK]              # (Dp, 128) - 1 vreg
            b1c = b1_ref[:, lo:lo + H_CHUNK]              # (1, 128)
            w2c = w2_ref[:, lo:lo + H_CHUNK]              # (1, 128)

            if rs >= mxu_min_rows:
                # Layer 1 on the otherwise-idle MXU (zero-padded K=8, f32 acc).
                h = jnp.dot(x_blk, w1c, preferred_element_type=jnp.float32) + b1c
            else:
                # Tiny K: VPU broadcast-MACs, no systolic fill/drain.
                h = jnp.broadcast_to(b1c, (rs, H_CHUNK))
                for d in range(dp):                       # Dp = 8, static unroll
                    h = h + x_blk[:, d:d + 1] * w1c[d:d + 1, :]

            h = jnp.maximum(h, 0.0)
            partial = partial + h * w2c                   # VALU accumulate

        # One 128-lane cross-lane reduce per sub-block (XLU), then scalar bias.
        o = jnp.sum(partial, axis=-1, keepdims=True) + b2
        o_ref[r0:r0 + rs, :] = o.astype(o_ref.dtype)
        r0 += rs


def _pick_tile(B, block_b):
    """Batch tile: sublane-aligned, capped at block_b, and >=2 grid steps when
    B > 8 so the work shards across both TensorCores on v7x."""
    if B <= 8:
        return 8
    half = _round_up((B + 1) // 2, 8)
    return min(block_b, half)


def baseline_forward_batched(xb, w1p, b1, w2, b2, *, block_b=512):
    """xb: (B, D) float32 -> (B, 1) float32 value estimates."""
    xb = jnp.asarray(xb, jnp.float32)
    B, D = xb.shape
    Dp, H = w1p.shape

    # pad features up to the pre-padded weight rows (zero rows contribute nothing)
    if D < Dp:
        xb = jnp.pad(xb, ((0, 0), (0, Dp - D)))

    tb = _pick_tile(B, block_b)
    Bp = _round_up(B, tb)
    if Bp != B:
        xb = jnp.pad(xb, ((0, Bp - B), (0, 0)))

    kernel = functools.partial(_mlp_kernel, sub_rows=SUB_ROWS,
                               mxu_min_rows=MXU_MIN_ROWS)

    out = pl.pallas_call(
        kernel,
        out_shape=jax.ShapeDtypeStruct((Bp, 1), jnp.float32),
        grid=(Bp // tb,),
        in_specs=[
            pl.BlockSpec((tb, Dp), lambda i: (i, 0)),            # x tile
            pl.BlockSpec((Dp, H), lambda i: (0, 0)),             # W1 resident
            pl.BlockSpec((1, H), lambda i: (0, 0)),              # b1 resident
            pl.BlockSpec((1, H), lambda i: (0, 0)),              # W2 row resident
            pl.BlockSpec(memory_space=pltpu.MemorySpace.SMEM),   # b2 scalar
        ],
        out_specs=pl.BlockSpec((tb, 1), lambda i: (i, 0)),
        compiler_params=pltpu.CompilerParams(
            dimension_semantics=("parallel",)),
    )(xb, w1p, b1, w2, b2)
    return out[:B]


def baseline_forward(x, w1p, b1, w2, b2):
    """Matches Baseline.forward: wrap a single observation as (1, -1), run MLP."""
    x_flat = jnp.asarray(x, jnp.float32).reshape(1, -1)
    return baseline_forward_batched(x_flat, w1p, b1, w2, b2)


def init_params(key, input_dim, hidden=HIDDEN):
    """PyTorch nn.Linear default init: U(-1/sqrt(fan_in), 1/sqrt(fan_in))."""
    k1, k2, k3, k4 = jax.random.split(key, 4)
    bound1 = 1.0 / jnp.sqrt(jnp.float32(input_dim))
    bound2 = 1.0 / jnp.sqrt(jnp.float32(hidden))
    w1 = jax.random.uniform(k1, (input_dim, hidden), jnp.float32, -bound1, bound1)
    b1 = jax.random.uniform(k2, (1, hidden), jnp.float32, -bound1, bound1)
    w2 = jax.random.uniform(k3, (1, hidden), jnp.float32, -bound2, bound2)  # row
    b2 = jax.random.uniform(k4, (1, 1), jnp.float32, -bound2, bound2)
    # pre-pad W1 rows to a sublane multiple (8): dense tile, unmasked loads
    Dp = _round_up(input_dim, 8)
    w1p = jnp.zeros((Dp, hidden), jnp.float32).at[:input_dim].set(w1)
    return w1, w1p, b1, w2, b2


if __name__ == "__main__":
    key = jax.random.PRNGKey(0)
    k_x, k_xb, k_xl, k_p = jax.random.split(key, 4)

    input_shape = (6,)  # Acrobot observation: 6-dim state vector
    D = 1
    for d in input_shape:
        D *= d

    w1, w1p, b1, w2, b2 = init_params(k_p, D, hidden=HIDDEN)

    def ref_fn(xr):
        return jnp.maximum(xr @ w1 + b1, 0.0) @ w2.T + b2

    # --- single observation: exact semantics of Baseline.forward ---
    x = jax.random.normal(k_x, input_shape, jnp.float32)
    out1 = jax.block_until_ready(baseline_forward(x, w1p, b1, w2, b2))
    ref1 = ref_fn(x.reshape(1, -1))
    assert out1.shape == (1, 1)
    assert jnp.allclose(out1, ref1, atol=1e-4, rtol=1e-4)

    # --- small batch: VPU broadcast-MAC path, 2 grid steps (both TCs on v7x) ---
    B = 16
    xb = jax.random.normal(k_xb, (B, D), jnp.float32)
    outb = jax.block_until_ready(baseline_forward_batched(xb, w1p, b1, w2, b2))
    refb = ref_fn(xb)
    assert outb.shape == (B, 1)
    assert jnp.allclose(outb, refb, atol=1e-4, rtol=1e-4)

    # --- larger rollout batch: exercises the MXU layer-1 path (128-row
    #     sub-blocks) plus the VPU remainder sub-block and batch padding ---
    BL = 300
    xl = jax.random.normal(k_xl, (BL, D), jnp.float32)
    outl = jax.block_until_ready(baseline_forward_batched(xl, w1p, b1, w2, b2))
    refl = ref_fn(xl)
    assert outl.shape == (BL, 1)
    assert jnp.allclose(outl, refl, atol=1e-4, rtol=1e-4)

    print("KERNEL_OK")
</pallas_src>

<mosaic_0001>
module attributes {stable_mosaic.version = 11 : i64} {
  func.func @_mlp_kernel(%arg0: i32, %arg1: memref<8x8xf32, #tpu.memory_space<vmem>>, %arg2: memref<8x512xf32, #tpu.memory_space<vmem>>, %arg3: memref<1x512xf32, #tpu.memory_space<vmem>>, %arg4: memref<1x512xf32, #tpu.memory_space<vmem>>, %arg5: memref<1x1xf32, #tpu.memory_space<smem>>, %arg6: memref<8x1xf32, #tpu.memory_space<vmem>>) attributes {dimension_semantics = [#tpu.dimension_semantics<parallel>], iteration_bounds = array<i64: 1>, scalar_prefetch = 0 : i64, scratch_operands = 0 : i64, tpu.core_type = #tpu.core_type<tc>, window_params = [{transform_indices = @transform_0, window_bounds = array<i64: 8, 8>}, {pipeline_mode = #tpu.pipeline_mode<synchronous>, transform_indices = @transform_1, window_bounds = array<i64: 8, 512>}, {pipeline_mode = #tpu.pipeline_mode<synchronous>, transform_indices = @transform_2, window_bounds = array<i64: 1, 512>}, {pipeline_mode = #tpu.pipeline_mode<synchronous>, transform_indices = @transform_3, window_bounds = array<i64: 1, 512>}, {transform_indices = @transform_4, window_bounds = array<i64: 1, 1>}, {transform_indices = @transform_5, window_bounds = array<i64: 8, 1>}]} {
    %c0 = arith.constant 0 : index
    %c0_0 = arith.constant 0 : index
    %0 = memref.load %arg5[%c0, %c0_0] : memref<1x1xf32, #tpu.memory_space<smem>>
    %c0_1 = arith.constant 0 : index
    %c0_2 = arith.constant 0 : index
    %1 = vector.load %arg1[%c0_1, %c0_2] : memref<8x8xf32, #tpu.memory_space<vmem>>, vector<8x8xf32>
    %cst = arith.constant 0.000000e+00 : f32
    %2 = vector.broadcast %cst : f32 to vector<8x128xf32>
    %c0_3 = arith.constant 0 : index
    %c0_4 = arith.constant 0 : index
    %3 = vector.load %arg2[%c0_3, %c0_4] : memref<8x512xf32, #tpu.memory_space<vmem>>, vector<8x128xf32>
    %c0_5 = arith.constant 0 : index
    %c0_6 = arith.constant 0 : index
    %4 = vector.load %arg3[%c0_5, %c0_6] : memref<1x512xf32, #tpu.memory_space<vmem>>, vector<1x128xf32>
    %c0_7 = arith.constant 0 : index
    %c0_8 = arith.constant 0 : index
    %5 = vector.load %arg4[%c0_7, %c0_8] : memref<1x512xf32, #tpu.memory_space<vmem>>, vector<1x128xf32>
    %6 = vector.shape_cast %4 : vector<1x128xf32> to vector<1x128xf32>
    %7 = vector.broadcast %6 : vector<1x128xf32> to vector<8x128xf32>
    %8 = vector.extract_strided_slice %1 {offsets = [0, 0], sizes = [8, 1], strides = [1, 1]} : vector<8x8xf32> to vector<8x1xf32>
    %9 = vector.extract_strided_slice %3 {offsets = [0, 0], sizes = [1, 128], strides = [1, 1]} : vector<8x128xf32> to vector<1x128xf32>
    %10 = vector.broadcast %8 : vector<8x1xf32> to vector<8x128xf32>
    %11 = vector.broadcast %9 : vector<1x128xf32> to vector<8x128xf32>
    %12 = arith.mulf %10, %11 : vector<8x128xf32>
    %13 = arith.addf %7, %12 : vector<8x128xf32>
    %14 = vector.extract_strided_slice %1 {offsets = [0, 1], sizes = [8, 1], strides = [1, 1]} : vector<8x8xf32> to vector<8x1xf32>
    %15 = vector.extract_strided_slice %3 {offsets = [1, 0], sizes = [1, 128], strides = [1, 1]} : vector<8x128xf32> to vector<1x128xf32>
    %16 = vector.broadcast %14 : vector<8x1xf32> to vector<8x128xf32>
    %17 = vector.broadcast %15 : vector<1x128xf32> to vector<8x128xf32>
    %18 = arith.mulf %16, %17 : vector<8x128xf32>
    %19 = arith.addf %13, %18 : vector<8x128xf32>
    %20 = vector.extract_strided_slice %1 {offsets = [0, 2], sizes = [8, 1], strides = [1, 1]} : vector<8x8xf32> to vector<8x1xf32>
    %21 = vector.extract_strided_slice %3 {offsets = [2, 0], sizes = [1, 128], strides = [1, 1]} : vector<8x128xf32> to vector<1x128xf32>
    %22 = vector.broadcast %20 : vector<8x1xf32> to vector<8x128xf32>
    %23 = vector.broadcast %21 : vector<1x128xf32> to vector<8x128xf32>
    %24 = arith.mulf %22, %23 : vector<8x128xf32>
    %25 = arith.addf %19, %24 : vector<8x128xf32>
    %26 = vector.extract_strided_slice %1 {offsets = [0, 3], sizes = [8, 1], strides = [1, 1]} : vector<8x8xf32> to vector<8x1xf32>
    %27 = vector.extract_strided_slice %3 {offsets = [3, 0], sizes = [1, 128], strides = [1, 1]} : vector<8x128xf32> to vector<1x128xf32>
    %28 = vector.broadcast %26 : vector<8x1xf32> to vector<8x128xf32>
    %29 = vector.broadcast %27 : vector<1x128xf32> to vector<8x128xf32>
    %30 = arith.mulf %28, %29 : vector<8x128xf32>
    %31 = arith.addf %25, %30 : vector<8x128xf32>
    %32 = vector.extract_strided_slice %1 {offsets = [0, 4], sizes = [8, 1], strides = [1, 1]} : vector<8x8xf32> to vector<8x1xf32>
    %33 = vector.extract_strided_slice %3 {offsets = [4, 0], sizes = [1, 128], strides = [1, 1]} : vector<8x128xf32> to vector<1x128xf32>
    %34 = vector.broadcast %32 : vector<8x1xf32> to vector<8x128xf32>
    %35 = vector.broadcast %33 : vector<1x128xf32> to vector<8x128xf32>
    %36 = arith.mulf %34, %35 : vector<8x128xf32>
    %37 = arith.addf %31, %36 : vector<8x128xf32>
    %38 = vector.extract_strided_slice %1 {offsets = [0, 5], sizes = [8, 1], strides = [1, 1]} : vector<8x8xf32> to vector<8x1xf32>
    %39 = vector.extract_strided_slice %3 {offsets = [5, 0], sizes = [1, 128], strides = [1, 1]} : vector<8x128xf32> to vector<1x128xf32>
    %40 = vector.broadcast %38 : vector<8x1xf32> to vector<8x128xf32>
    %41 = vector.broadcast %39 : vector<1x128xf32> to vector<8x128xf32>
    %42 = arith.mulf %40, %41 : vector<8x128xf32>
    %43 = arith.addf %37, %42 : vector<8x128xf32>
    %44 = vector.extract_strided_slice %1 {offsets = [0, 6], sizes = [8, 1], strides = [1, 1]} : vector<8x8xf32> to vector<8x1xf32>
    %45 = vector.extract_strided_slice %3 {offsets = [6, 0], sizes = [1, 128], strides = [1, 1]} : vector<8x128xf32> to vector<1x128xf32>
    %46 = vector.broadcast %44 : vector<8x1xf32> to vector<8x128xf32>
    %47 = vector.broadcast %45 : vector<1x128xf32> to vector<8x128xf32>
    %48 = arith.mulf %46, %47 : vector<8x128xf32>
    %49 = arith.addf %43, %48 : vector<8x128xf32>
    %50 = vector.extract_strided_slice %1 {offsets = [0, 7], sizes = [8, 1], strides = [1, 1]} : vector<8x8xf32> to vector<8x1xf32>
    %51 = vector.extract_strided_slice %3 {offsets = [7, 0], sizes = [1, 128], strides = [1, 1]} : vector<8x128xf32> to vector<1x128xf32>
    %52 = vector.broadcast %50 : vector<8x1xf32> to vector<8x128xf32>
    %53 = vector.broadcast %51 : vector<1x128xf32> to vector<8x128xf32>
    %54 = arith.mulf %52, %53 : vector<8x128xf32>
    %55 = arith.addf %49, %54 : vector<8x128xf32>
    %cst_9 = arith.constant 0.000000e+00 : f32
    %56 = vector.broadcast %cst_9 : f32 to vector<8x128xf32>
    %57 = arith.maximumf %55, %56 : vector<8x128xf32>
    %58 = vector.broadcast %5 : vector<1x128xf32> to vector<8x128xf32>
    %59 = arith.mulf %57, %58 : vector<8x128xf32>
    %60 = arith.addf %2, %59 : vector<8x128xf32>
    %c0_10 = arith.constant 0 : index
    %c128 = arith.constant 128 : index
    %61 = vector.load %arg2[%c0_10, %c128] : memref<8x512xf32, #tpu.memory_space<vmem>>, vector<8x128xf32>
    %c0_11 = arith.constant 0 : index
    %c128_12 = arith.constant 128 : index
    %62 = vector.load %arg3[%c0_11, %c128_12] : memref<1x512xf32, #tpu.memory_space<vmem>>, vector<1x128xf32>
    %c0_13 = arith.constant 0 : index
    %c128_14 = arith.constant 128 : index
    %63 = vector.load %arg4[%c0_13, %c128_14] : memref<1x512xf32, #tpu.memory_space<vmem>>, vector<1x128xf32>
    %64 = vector.shape_cast %62 : vector<1x128xf32> to vector<1x128xf32>
    %65 = vector.broadcast %64 : vector<1x128xf32> to vector<8x128xf32>
    %66 = vector.extract_strided_slice %1 {offsets = [0, 0], sizes = [8, 1], strides = [1, 1]} : vector<8x8xf32> to vector<8x1xf32>
    %67 = vector.extract_strided_slice %61 {offsets = [0, 0], sizes = [1, 128], strides = [1, 1]} : vector<8x128xf32> to vector<1x128xf32>
    %68 = vector.broadcast %66 : vector<8x1xf32> to vector<8x128xf32>
    %69 = vector.broadcast %67 : vector<1x128xf32> to vector<8x128xf32>
    %70 = arith.mulf %68, %69 : vector<8x128xf32>
    %71 = arith.addf %65, %70 : vector<8x128xf32>
    %72 = vector.extract_strided_slice %1 {offsets = [0, 1], sizes = [8, 1], strides = [1, 1]} : vector<8x8xf32> to vector<8x1xf32>
    %73 = vector.extract_strided_slice %61 {offsets = [1, 0], sizes = [1, 128], strides = [1, 1]} : vector<8x128xf32> to vector<1x128xf32>
    %74 = vector.broadcast %72 : vector<8x1xf32> to vector<8x128xf32>
    %75 = vector.broadcast %73 : vector<1x128xf32> to vector<8x128xf32>
    %76 = arith.mulf %74, %75 : vector<8x128xf32>
    %77 = arith.addf %71, %76 : vector<8x128xf32>
    %78 = vector.extract_strided_slice %1 {offsets = [0, 2], sizes = [8, 1], strides = [1, 1]} : vector<8x8xf32> to vector<8x1xf32>
    %79 = vector.extract_strided_slice %61 {offsets = [2, 0], sizes = [1, 128], strides = [1, 1]} : vector<8x128xf32> to vector<1x128xf32>
    %80 = vector.broadcast %78 : vector<8x1xf32> to vector<8x128xf32>
    %81 = vector.broadcast %79 : vector<1x128xf32> to vector<8x128xf32>
    %82 = arith.mulf %80, %81 : vector<8x128xf32>
    %83 = arith.addf %77, %82 : vector<8x128xf32>
    %84 = vector.extract_strided_slice %1 {offsets = [0, 3], sizes = [8, 1], strides = [1, 1]} : vector<8x8xf32> to vector<8x1xf32>
    %85 = vector.extract_strided_slice %61 {offsets = [3, 0], sizes = [1, 128], strides = [1, 1]} : vector<8x128xf32> to vector<1x128xf32>
    %86 = vector.broadcast %84 : vector<8x1xf32> to vector<8x128xf32>
    %87 = vector.broadcast %85 : vector<1x128xf32> to vector<8x128xf32>
    %88 = arith.mulf %86, %87 : vector<8x128xf32>
    %89 = arith.addf %83, %88 : vector<8x128xf32>
    %90 = vector.extract_strided_slice %1 {offsets = [0, 4], sizes = [8, 1], strides = [1, 1]} : vector<8x8xf32> to vector<8x1xf32>
    %91 = vector.extract_strided_slice %61 {offsets = [4, 0], sizes = [1, 128], strides = [1, 1]} : vector<8x128xf32> to vector<1x128xf32>
    %92 = vector.broadcast %90 : vector<8x1xf32> to vector<8x128xf32>
    %93 = vector.broadcast %91 : vector<1x128xf32> to vector<8x128xf32>
    %94 = arith.mulf %92, %93 : vector<8x128xf32>
    %95 = arith.addf %89, %94 : vector<8x128xf32>
    %96 = vector.extract_strided_slice %1 {offsets = [0, 5], sizes = [8, 1], strides = [1, 1]} : vector<8x8xf32> to vector<8x1xf32>
    %97 = vector.extract_strided_slice %61 {offsets = [5, 0], sizes = [1, 128], strides = [1, 1]} : vector<8x128xf32> to vector<1x128xf32>
    %98 = vector.broadcast %96 : vector<8x1xf32> to vector<8x128xf32>
    %99 = vector.broadcast %97 : vector<1x128xf32> to vector<8x128xf32>
    %100 = arith.mulf %98, %99 : vector<8x128xf32>
    %101 = arith.addf %95, %100 : vector<8x128xf32>
    %102 = vector.extract_strided_slice %1 {offsets = [0, 6], sizes = [8, 1], strides = [1, 1]} : vector<8x8xf32> to vector<8x1xf32>
    %103 = vector.extract_strided_slice %61 {offsets = [6, 0], sizes = [1, 128], strides = [1, 1]} : vector<8x128xf32> to vector<1x128xf32>
    %104 = vector.broadcast %102 : vector<8x1xf32> to vector<8x128xf32>
    %105 = vector.broadcast %103 : vector<1x128xf32> to vector<8x128xf32>
    %106 = arith.mulf %104, %105 : vector<8x128xf32>
    %107 = arith.addf %101, %106 : vector<8x128xf32>
    %108 = vector.extract_strided_slice %1 {offsets = [0, 7], sizes = [8, 1], strides = [1, 1]} : vector<8x8xf32> to vector<8x1xf32>
    %109 = vector.extract_strided_slice %61 {offsets = [7, 0], sizes = [1, 128], strides = [1, 1]} : vector<8x128xf32> to vector<1x128xf32>
    %110 = vector.broadcast %108 : vector<8x1xf32> to vector<8x128xf32>
    %111 = vector.broadcast %109 : vector<1x128xf32> to vector<8x128xf32>
    %112 = arith.mulf %110, %111 : vector<8x128xf32>
    %113 = arith.addf %107, %112 : vector<8x128xf32>
    %cst_15 = arith.constant 0.000000e+00 : f32
    %114 = vector.broadcast %cst_15 : f32 to vector<8x128xf32>
    %115 = arith.maximumf %113, %114 : vector<8x128xf32>
    %116 = vector.broadcast %63 : vector<1x128xf32> to vector<8x128xf32>
    %117 = arith.mulf %115, %116 : vector<8x128xf32>
    %118 = arith.addf %60, %117 : vector<8x128xf32>
    %c0_16 = arith.constant 0 : index
    %c256 = arith.constant 256 : index
    %119 = vector.load %arg2[%c0_16, %c256] : memref<8x512xf32, #tpu.memory_space<vmem>>, vector<8x128xf32>
    %c0_17 = arith.constant 0 : index
    %c256_18 = arith.constant 256 : index
    %120 = vector.load %arg3[%c0_17, %c256_18] : memref<1x512xf32, #tpu.memory_space<vmem>>, vector<1x128xf32>
    %c0_19 = arith.constant 0 : index
    %c256_20 = arith.constant 256 : index
    %121 = vector.load %arg4[%c0_19, %c256_20] : memref<1x512xf32, #tpu.memory_space<vmem>>, vector<1x128xf32>
    %122 = vector.shape_cast %120 : vector<1x128xf32> to vector<1x128xf32>
    %123 = vector.broadcast %122 : vector<1x128xf32> to vector<8x128xf32>
    %124 = vector.extract_strided_slice %1 {offsets = [0, 0], sizes = [8, 1], strides = [1, 1]} : vector<8x8xf32> to vector<8x1xf32>
    %125 = vector.extract_strided_slice %119 {offsets = [0, 0], sizes = [1, 128], strides = [1, 1]} : vector<8x128xf32> to vector<1x128xf32>
    %126 = vector.broadcast %124 : vector<8x1xf32> to vector<8x128xf32>
    %127 = vector.broadcast %125 : vector<1x128xf32> to vector<8x128xf32>
    %128 = arith.mulf %126, %127 : vector<8x128xf32>
    %129 = arith.addf %123, %128 : vector<8x128xf32>
    %130 = vector.extract_strided_slice %1 {offsets = [0, 1], sizes = [8, 1], strides = [1, 1]} : vector<8x8xf32> to vector<8x1xf32>
    %131 = vector.extract_strided_slice %119 {offsets = [1, 0], sizes = [1, 128], strides = [1, 1]} : vector<8x128xf32> to vector<1x128xf32>
    %132 = vector.broadcast %130 : vector<8x1xf32> to vector<8x128xf32>
    %133 = vector.broadcast %131 : vector<1x128xf32> to vector<8x128xf32>
    %134 = arith.mulf %132, %133 : vector<8x128xf32>
    %135 = arith.addf %129, %134 : vector<8x128xf32>
    %136 = vector.extract_strided_slice %1 {offsets = [0, 2], sizes = [8, 1], strides = [1, 1]} : vector<8x8xf32> to vector<8x1xf32>
    %137 = vector.extract_strided_slice %119 {offsets = [2, 0], sizes = [1, 128], strides = [1, 1]} : vector<8x128xf32> to vector<1x128xf32>
    %138 = vector.broadcast %136 : vector<8x1xf32> to vector<8x128xf32>
    %139 = vector.broadcast %137 : vector<1x128xf32> to vector<8x128xf32>
    %140 = arith.mulf %138, %139 : vector<8x128xf32>
    %141 = arith.addf %135, %140 : vector<8x128xf32>
    %142 = vector.extract_strided_slice %1 {offsets = [0, 3], sizes = [8, 1], strides = [1, 1]} : vector<8x8xf32> to vector<8x1xf32>
    %143 = vector.extract_strided_slice %119 {offsets = [3, 0], sizes = [1, 128], strides = [1, 1]} : vector<8x128xf32> to vector<1x128xf32>
    %144 = vector.broadcast %142 : vector<8x1xf32> to vector<8x128xf32>
    %145 = vector.broadcast %143 : vector<1x128xf32> to vector<8x128xf32>
    %146 = arith.mulf %144, %145 : vector<8x128xf32>
    %147 = arith.addf %141, %146 : vector<8x128xf32>
    %148 = vector.extract_strided_slice %1 {offsets = [0, 4], sizes = [8, 1], strides = [1, 1]} : vector<8x8xf32> to vector<8x1xf32>
    %149 = vector.extract_strided_slice %119 {offsets = [4, 0], sizes = [1, 128], strides = [1, 1]} : vector<8x128xf32> to vector<1x128xf32>
    %150 = vector.broadcast %148 : vector<8x1xf32> to vector<8x128xf32>
    %151 = vector.broadcast %149 : vector<1x128xf32> to vector<8x128xf32>
    %152 = arith.mulf %150, %151 : vector<8x128xf32>
    %153 = arith.addf %147, %152 : vector<8x128xf32>
    %154 = vector.extract_strided_slice %1 {offsets = [0, 5], sizes = [8, 1], strides = [1, 1]} : vector<8x8xf32> to vector<8x1xf32>
    %155 = vector.extract_strided_slice %119 {offsets = [5, 0], sizes = [1, 128], strides = [1, 1]} : vector<8x128xf32> to vector<1x128xf32>
    %156 = vector.broadcast %154 : vector<8x1xf32> to vector<8x128xf32>
    %157 = vector.broadcast %155 : vector<1x128xf32> to vector<8x128xf32>
    %158 = arith.mulf %156, %157 : vector<8x128xf32>
    %159 = arith.addf %153, %158 : vector<8x128xf32>
    %160 = vector.extract_strided_slice %1 {offsets = [0, 6], sizes = [8, 1], strides = [1, 1]} : vector<8x8xf32> to vector<8x1xf32>
    %161 = vector.extract_strided_slice %119 {offsets = [6, 0], sizes = [1, 128], strides = [1, 1]} : vector<8x128xf32> to vector<1x128xf32>
    %162 = vector.broadcast %160 : vector<8x1xf32> to vector<8x128xf32>
    %163 = vector.broadcast %161 : vector<1x128xf32> to vector<8x128xf32>
    %164 = arith.mulf %162, %163 : vector<8x128xf32>
    %165 = arith.addf %159, %164 : vector<8x128xf32>
    %166 = vector.extract_strided_slice %1 {offsets = [0, 7], sizes = [8, 1], strides = [1, 1]} : vector<8x8xf32> to vector<8x1xf32>
    %167 = vector.extract_strided_slice %119 {offsets = [7, 0], sizes = [1, 128], strides = [1, 1]} : vector<8x128xf32> to vector<1x128xf32>
    %168 = vector.broadcast %166 : vector<8x1xf32> to vector<8x128xf32>
    %169 = vector.broadcast %167 : vector<1x128xf32> to vector<8x128xf32>
    %170 = arith.mulf %168, %169 : vector<8x128xf32>
    %171 = arith.addf %165, %170 : vector<8x128xf32>
    %cst_21 = arith.constant 0.000000e+00 : f32
    %172 = vector.broadcast %cst_21 : f32 to vector<8x128xf32>
    %173 = arith.maximumf %171, %172 : vector<8x128xf32>
    %174 = vector.broadcast %121 : vector<1x128xf32> to vector<8x128xf32>
    %175 = arith.mulf %173, %174 : vector<8x128xf32>
    %176 = arith.addf %118, %175 : vector<8x128xf32>
    %c0_22 = arith.constant 0 : index
    %c384 = arith.constant 384 : index
    %177 = vector.load %arg2[%c0_22, %c384] : memref<8x512xf32, #tpu.memory_space<vmem>>, vector<8x128xf32>
    %c0_23 = arith.constant 0 : index
    %c384_24 = arith.constant 384 : index
    %178 = vector.load %arg3[%c0_23, %c384_24] : memref<1x512xf32, #tpu.memory_space<vmem>>, vector<1x128xf32>
    %c0_25 = arith.constant 0 : index
    %c384_26 = arith.constant 384 : index
    %179 = vector.load %arg4[%c0_25, %c384_26] : memref<1x512xf32, #tpu.memory_space<vmem>>, vector<1x128xf32>
    %180 = vector.shape_cast %178 : vector<1x128xf32> to vector<1x128xf32>
    %181 = vector.broadcast %180 : vector<1x128xf32> to vector<8x128xf32>
    %182 = vector.extract_strided_slice %1 {offsets = [0, 0], sizes = [8, 1], strides = [1, 1]} : vector<8x8xf32> to vector<8x1xf32>
    %183 = vector.extract_strided_slice %177 {offsets = [0, 0], sizes = [1, 128], strides = [1, 1]} : vector<8x128xf32> to vector<1x128xf32>
    %184 = vector.broadcast %182 : vector<8x1xf32> to vector<8x128xf32>
    %185 = vector.broadcast %183 : vector<1x128xf32> to vector<8x128xf32>
    %186 = arith.mulf %184, %185 : vector<8x128xf32>
    %187 = arith.addf %181, %186 : vector<8x128xf32>
    %188 = vector.extract_strided_slice %1 {offsets = [0, 1], sizes = [8, 1], strides = [1, 1]} : vector<8x8xf32> to vector<8x1xf32>
    %189 = vector.extract_strided_slice %177 {offsets = [1, 0], sizes = [1, 128], strides = [1, 1]} : vector<8x128xf32> to vector<1x128xf32>
    %190 = vector.broadcast %188 : vector<8x1xf32> to vector<8x128xf32>
    %191 = vector.broadcast %189 : vector<1x128xf32> to vector<8x128xf32>
    %192 = arith.mulf %190, %191 : vector<8x128xf32>
    %193 = arith.addf %187, %192 : vector<8x128xf32>
    %194 = vector.extract_strided_slice %1 {offsets = [0, 2], sizes = [8, 1], strides = [1, 1]} : vector<8x8xf32> to vector<8x1xf32>
    %195 = vector.extract_strided_slice %177 {offsets = [2, 0], sizes = [1, 128], strides = [1, 1]} : vector<8x128xf32> to vector<1x128xf32>
    %196 = vector.broadcast %194 : vector<8x1xf32> to vector<8x128xf32>
    %197 = vector.broadcast %195 : vector<1x128xf32> to vector<8x128xf32>
    %198 = arith.mulf %196, %197 : vector<8x128xf32>
    %199 = arith.addf %193, %198 : vector<8x128xf32>
    %200 = vector.extract_strided_slice %1 {offsets = [0, 3], sizes = [8, 1], strides = [1, 1]} : vector<8x8xf32> to vector<8x1xf32>
    %201 = vector.extract_strided_slice %177 {offsets = [3, 0], sizes = [1, 128], strides = [1, 1]} : vector<8x128xf32> to vector<1x128xf32>
    %202 = vector.broadcast %200 : vector<8x1xf32> to vector<8x128xf32>
    %203 = vector.broadcast %201 : vector<1x128xf32> to vector<8x128xf32>
    %204 = arith.mulf %202, %203 : vector<8x128xf32>
    %205 = arith.addf %199, %204 : vector<8x128xf32>
    %206 = vector.extract_strided_slice %1 {offsets = [0, 4], sizes = [8, 1], strides = [1, 1]} : vector<8x8xf32> to vector<8x1xf32>
    %207 = vector.extract_strided_slice %177 {offsets = [4, 0], sizes = [1, 128], strides = [1, 1]} : vector<8x128xf32> to vector<1x128xf32>
    %208 = vector.broadcast %206 : vector<8x1xf32> to vector<8x128xf32>
    %209 = vector.broadcast %207 : vector<1x128xf32> to vector<8x128xf32>
    %210 = arith.mulf %208, %209 : vector<8x128xf32>
    %211 = arith.addf %205, %210 : vector<8x128xf32>
    %212 = vector.extract_strided_slice %1 {offsets = [0, 5], sizes = [8, 1], strides = [1, 1]} : vector<8x8xf32> to vector<8x1xf32>
    %213 = vector.extract_strided_slice %177 {offsets = [5, 0], sizes = [1, 128], strides = [1, 1]} : vector<8x128xf32> to vector<1x128xf32>
    %214 = vector.broadcast %212 : vector<8x1xf32> to vector<8x128xf32>
    %215 = vector.broadcast %213 : vector<1x128xf32> to vector<8x128xf32>
    %216 = arith.mulf %214, %215 : vector<8x128xf32>
    %217 = arith.addf %211, %216 : vector<8x128xf32>
    %218 = vector.extract_strided_slice %1 {offsets = [0, 6], sizes = [8, 1], strides = [1, 1]} : vector<8x8xf32> to vector<8x1xf32>
    %219 = vector.extract_strided_slice %177 {offsets = [6, 0], sizes = [1, 128], strides = [1, 1]} : vector<8x128xf32> to vector<1x128xf32>
    %220 = vector.broadcast %218 : vector<8x1xf32> to vector<8x128xf32>
    %221 = vector.broadcast %219 : vector<1x128xf32> to vector<8x128xf32>
    %222 = arith.mulf %220, %221 : vector<8x128xf32>
    %223 = arith.addf %217, %222 : vector<8x128xf32>
    %224 = vector.extract_strided_slice %1 {offsets = [0, 7], sizes = [8, 1], strides = [1, 1]} : vector<8x8xf32> to vector<8x1xf32>
    %225 = vector.extract_strided_slice %177 {offsets = [7, 0], sizes = [1, 128], strides = [1, 1]} : vector<8x128xf32> to vector<1x128xf32>
    %226 = vector.broadcast %224 : vector<8x1xf32> to vector<8x128xf32>
    %227 = vector.broadcast %225 : vector<1x128xf32> to vector<8x128xf32>
    %228 = arith.mulf %226, %227 : vector<8x128xf32>
    %229 = arith.addf %223, %228 : vector<8x128xf32>
    %cst_27 = arith.constant 0.000000e+00 : f32
    %230 = vector.broadcast %cst_27 : f32 to vector<8x128xf32>
    %231 = arith.maximumf %229, %230 : vector<8x128xf32>
    %232 = vector.broadcast %179 : vector<1x128xf32> to vector<8x128xf32>
    %233 = arith.mulf %231, %232 : vector<8x128xf32>
    %234 = arith.addf %176, %233 : vector<8x128xf32>
    %cst_28 = arith.constant dense<0.000000e+00> : vector<8xf32>
    %235 = vector.multi_reduction <add>, %234, %cst_28 [1] : vector<8x128xf32> to vector<8xf32>
    %236 = vector.shape_cast %235 : vector<8xf32> to vector<8x1xf32>
    %237 = vector.broadcast %0 : f32 to vector<8x1xf32>
    %238 = arith.addf %236, %237 : vector<8x1xf32>
    %c0_29 = arith.constant 0 : index
    %c0_30 = arith.constant 0 : index
    %239 = vector.load %arg6[%c0_29, %c0_30] : memref<8x1xf32, #tpu.memory_space<vmem>>, vector<8x1xf32>
    tpu.vector_store %arg6[%c0_29, %c0_30], %238 {strides = array<i32>} : memref<8x1xf32, #tpu.memory_space<vmem>>, vector<8x1xf32>,
    return
  }
  func.func @transform_0(%arg0: i32) -> (i32, i32) {
    %c0_i32 = arith.constant 0 : i32
    %c0_i32_0 = arith.constant 0 : i32
    return %arg0, %c0_i32 : i32, i32
  }
  func.func @transform_1(%arg0: i32) -> (i32, i32) {
    %c0_i32 = arith.constant 0 : i32
    %c0_i32_0 = arith.constant 0 : i32
    %c0_i32_1 = arith.constant 0 : i32
    return %c0_i32, %c0_i32_0 : i32, i32
  }
  func.func @transform_2(%arg0: i32) -> (i32, i32) {
    %c0_i32 = arith.constant 0 : i32
    %c0_i32_0 = arith.constant 0 : i32
    %c0_i32_1 = arith.constant 0 : i32
    return %c0_i32, %c0_i32_0 : i32, i32
  }
  func.func @transform_3(%arg0: i32) -> (i32, i32) {
    %c0_i32 = arith.constant 0 : i32
    %c0_i32_0 = arith.constant 0 : i32
    %c0_i32_1 = arith.constant 0 : i32
    return %c0_i32, %c0_i32_0 : i32, i32
  }
  func.func @transform_4(%arg0: i32) -> (i32, i32) {
    %c0_i32 = arith.constant 0 : i32
    %c0_i32_0 = arith.constant 0 : i32
    %c0_i32_1 = arith.constant 0 : i32
    return %c0_i32, %c0_i32_0 : i32, i32
  }
  func.func @transform_5(%arg0: i32) -> (i32, i32) {
    %c0_i32 = arith.constant 0 : i32
    %c0_i32_0 = arith.constant 0 : i32
    return %arg0, %c0_i32 : i32, i32
  }
}

</mosaic_0001>

<llo_original>
// kernel: tpu_custom_call.1
$region0: #{tpu_custom_call.1}
  #allocation0 [shape = 'u32[]', space=smem, size = 0x4, offset = 0x4, fixed_abs, tag = 'smem constant byte address 0x4 - core index']
  #allocation1 [shape = 'u32[144,128]{1,0:T(1,128)}', space=vmem, size = 0x12000, scoped, tag = 'internal scratch']
  #allocation2 [shape = 'f32[1,1]{1,0:T(1,128)S(6)}', space=smem, size = 0x200, scoped, tag = 'scoped memory for tpu_custom_call.1']
  %s0 = inlined_call_operand.hbm [shape: f32[8,8], index: 0, kind: input, shape index: {}]
  %s1 = inlined_call_operand.hbm [shape: f32[8,512], index: 1, kind: input, shape index: {}]
  %s2 = inlined_call_operand.vmem [shape: f32[1,512], index: 2, kind: input, shape index: {}]
  %s3 = inlined_call_operand.hbm [shape: f32[1,512], index: 3, kind: input, shape index: {}]
  %s4 = inlined_call_operand.<no memory space> [shape: f32[1,1], index: 4, kind: input, shape index: {}]
  %s5 = inlined_call_operand.vmem [shape: f32[8,1], index: 5, kind: output, shape index: {}]
  %s6 = sld [smem:[#allocation0]]
  $region42: #{tpu_custom_call.1} parent=0
    _
  %s8 = ssub.s32 1, %s6
  %s9 = scalar_select 0, %s8, %s6
  %10 = sst [smem:[#allocation2]] %s4
  $region1: #{tpu_custom_call.1} parent=0
    #allocation3 [shape = 'u8[4096]{0}', space=vmem, size = 0x1000, scoped, tag = 'input window, operand 0, single buffered']
    #allocation4 [shape = 's32[1]{0}', space=sflag, size = 0x4, scoped, tag = 'scoped memory for tpu_custom_call.1']
    #allocation5 [shape = 'u8[16384]{0}', space=vmem, size = 0x4000, scoped, tag = 'input window, operand 1, single buffered']
    #allocation6 [shape = 's32[1]{0}', space=sflag, size = 0x4, scoped, tag = 'scoped memory for tpu_custom_call.1']
    #allocation7 [shape = 'u8[2048]{0}', space=vmem, size = 0x800, scoped, tag = 'input window, operand 3, single buffered']
    %11 = vsyncpa [#allocation4], 0
    %12 = vsyncpa [#allocation6], 0
    // Predicated region
    $region2: #{tpu_custom_call.1} parent=1 // pred_check
      _
    $region3: #{tpu_custom_call.1} parent=1 // pred_check_branch
      %14 = sbr.rel (0) target = $region5
    $region4: #{tpu_custom_call.1} parent=1 // pred_region
      %s16 = ssub.s32 128, 128
      %17 = vsyncadd [#allocation4], %s16
      %s19 = sshll.u32 [#allocation3], 4
      %s20 = int_to_ptr.vmem [resolvable:$true] %s19
      %22 = dma.hbm_to_vmem [thread:$0]  %s0, 128, %s20, [#allocation4]
    $region5: #{tpu_custom_call.1} parent=1 // pred_fallthru
      _
    // Predicated region
    $region6: #{tpu_custom_call.1} parent=1 // pred_check
      _
    $region7: #{tpu_custom_call.1} parent=1 // pred_check_branch
      %24 = sbr.rel (0) target = $region9
    $region8: #{tpu_custom_call.1} parent=1 // pred_region
      %s26 = ssub.s32 512, 512
      %27 = vsyncadd [#allocation6], %s26
      %s29 = sshll.u32 [#allocation5], 4
      %s30 = int_to_ptr.vmem [resolvable:$true] %s29
      %32 = dma.hbm_to_vmem [thread:$0]  %s1, 512, %s30, [#allocation6]
    $region9: #{tpu_custom_call.1} parent=1 // pred_fallthru
      _
    // Predicated region
    $region10: #{tpu_custom_call.1} parent=1 // pred_check
      _
    $region11: #{tpu_custom_call.1} parent=1 // pred_check_branch
      %34 = sbr.rel (0) target = $region13
    $region12: #{tpu_custom_call.1} parent=1 // pred_region
      _
    $region13: #{tpu_custom_call.1} parent=1 // pred_fallthru
      _
    // Predicated region
    $region14: #{tpu_custom_call.1} parent=1 // pred_check
      _
    $region15: #{tpu_custom_call.1} parent=1 // pred_check_branch
      %36 = sbr.rel (0) target = $region17
    $region16: #{tpu_custom_call.1} parent=1 // pred_region
      %s38 = ssub.s32 64, 64
      %39 = vsyncadd [#allocation6], %s38
      %s41 = sshll.u32 [#allocation7], 4
      %s42 = int_to_ptr.vmem [resolvable:$true] %s41
      %44 = dma.hbm_to_vmem [thread:$0]  %s3, 64, %s42, [#allocation6]
    $region17: #{tpu_custom_call.1} parent=1 // pred_fallthru
      _
    // Predicated region
    $region18: #{tpu_custom_call.1} parent=1 // pred_check
      _
    $region19: #{tpu_custom_call.1} parent=1 // pred_check_branch
      %46 = sbr.rel (0) target = $region21
    $region20: #{tpu_custom_call.1} parent=1 // pred_region
      _
    $region21: #{tpu_custom_call.1} parent=1 // pred_fallthru
      _
    // Predicated region
    $region22: #{tpu_custom_call.1} parent=1 // pred_check
      _
    $region23: #{tpu_custom_call.1} parent=1 // pred_check_branch
      %48 = sbr.rel (0) target = $region25
    $region24: #{tpu_custom_call.1} parent=1 // pred_region
      %49 = dma.done [#allocation4], 128
    $region25: #{tpu_custom_call.1} parent=1 // pred_fallthru
      _
    // Predicated region
    $region26: #{tpu_custom_call.1} parent=1 // pred_check
      _
    $region27: #{tpu_custom_call.1} parent=1 // pred_check_branch
      %51 = sbr.rel (0) target = $region29
    $region28: #{tpu_custom_call.1} parent=1 // pred_region
      %52 = dma.done [#allocation6], 512
    $region29: #{tpu_custom_call.1} parent=1 // pred_fallthru
      _
    // Predicated region
    $region30: #{tpu_custom_call.1} parent=1 // pred_check
      _
    $region31: #{tpu_custom_call.1} parent=1 // pred_check_branch
      %54 = sbr.rel (0) target = $region33
    $region32: #{tpu_custom_call.1} parent=1 // pred_region
      %55 = dma.done [#allocation6], 64
    $region33: #{tpu_custom_call.1} parent=1 // pred_fallthru
      _
    %s56 = sld [smem:[#allocation2]]
    %v57 = vld [vmem:[#allocation3] sm:$0xff]
    %v58 = vld [vmem:[#allocation5] sm:$0xff]
    %v59 = vld [vmem:[%s2] sm:$0x1]
    %v60 = vld [vmem:[#allocation7] sm:$0x1]
    %v62 = vlaneseq
    %v63 = vshrl.u32 %v62, 7
    %v64 = vsub.s32 0, %v63
    %v65 = vrot.slane %v59, %v64
    %68 = vset.pattern.permute.xlu0 0
    %69 = vperm.xlu0 %68, %v57
    %v70 = vpop.permute.xlu0 %69
    %v72 = vlaneseq
    %v73 = vshrl.u32 %v72, 7
    %v74 = vsub.s32 0, %v73
    %v75 = vrot.slane %v58, %v74
    %v76 = vmul.f32 %v70, %v75
    %v77 = vadd.f32 %v65, %v76
    %78 = vset.pattern.permute.xlu0 1
    %79 = vperm.xlu0 %78, %v57
    %v80 = vpop.permute.xlu0 %79
    %v82 = vlaneseq
    %v83 = vshrl.u32 %v82, 7
    %v84 = vsub.s32 1, %v83
    %v85 = vrot.slane %v58, %v84
    %v86 = vmul.f32 %v80, %v85
    %v87 = vadd.f32 %v77, %v86
    %88 = vset.pattern.permute.xlu0 2
    %89 = vperm.xlu0 %88, %v57
    %v90 = vpop.permute.xlu0 %89
    %v92 = vlaneseq
    %v93 = vshrl.u32 %v92, 7
    %v94 = vsub.s32 2, %v93
    %v95 = vrot.slane %v58, %v94
    %v96 = vmul.f32 %v90, %v95
    %v97 = vadd.f32 %v87, %v96
    %98 = vset.pattern.permute.xlu0 3
    %99 = vperm.xlu0 %98, %v57
    %v100 = vpop.permute.xlu0 %99
    %v102 = vlaneseq
    %v103 = vshrl.u32 %v102, 7
    %v104 = vsub.s32 3, %v103
    %v105 = vrot.slane %v58, %v104
    %v106 = vmul.f32 %v100, %v105
    %v107 = vadd.f32 %v97, %v106
    %108 = vset.pattern.permute.xlu0 4
    %109 = vperm.xlu0 %108, %v57
    %v110 = vpop.permute.xlu0 %109
    %v112 = vlaneseq
    %v113 = vshrl.u32 %v112, 7
    %v114 = vsub.s32 4, %v113
    %v115 = vrot.slane %v58, %v114
    %v116 = vmul.f32 %v110, %v115
    %v117 = vadd.f32 %v107, %v116
    %118 = vset.pattern.permute.xlu0 5
    %119 = vperm.xlu0 %118, %v57
    %v120 = vpop.permute.xlu0 %119
    %v122 = vlaneseq
    %v123 = vshrl.u32 %v122, 7
    %v124 = vsub.s32 5, %v123
    %v125 = vrot.slane %v58, %v124
    %v126 = vmul.f32 %v120, %v125
    %v127 = vadd.f32 %v117, %v126
    %128 = vset.pattern.permute.xlu0 6
    %129 = vperm.xlu0 %128, %v57
    %v130 = vpop.permute.xlu0 %129
    %v132 = vlaneseq
    %v133 = vshrl.u32 %v132, 7
    %v134 = vsub.s32 6, %v133
    %v135 = vrot.slane %v58, %v134
    %v136 = vmul.f32 %v130, %v135
    %v137 = vadd.f32 %v127, %v136
    %138 = vset.pattern.permute.xlu0 7
    %139 = vperm.xlu0 %138, %v57
    %v140 = vpop.permute.xlu0 %139
    %v142 = vlaneseq
    %v143 = vshrl.u32 %v142, 7
    %v144 = vsub.s32 7, %v143
    %v145 = vrot.slane %v58, %v144
    %v146 = vmul.f32 %v140, %v145
    %v147 = vadd.f32 %v137, %v146
    %v148 = vmax.f32 %v147, 0.0
    %v150 = vlaneseq
    %v151 = vshrl.u32 %v150, 7
    %v152 = vsub.s32 0, %v151
    %v153 = vrot.slane %v60, %v152
    %v155 = vmul.f32 %v148, %v153
    %v156 = vadd.f32 %v155, 0.0
    %v157 = vld [vmem:[#allocation5 + $0x8] sm:$0xff]
    %v158 = vld [vmem:[%s2 + $0x1] sm:$0x1]
    %v159 = vld [vmem:[#allocation7 + $0x1] sm:$0x1]
    %v161 = vlaneseq
    %v162 = vshrl.u32 %v161, 7
    %v163 = vsub.s32 0, %v162
    %v164 = vrot.slane %v158, %v163
    %v166 = vlaneseq
    %v167 = vshrl.u32 %v166, 7
    %v168 = vsub.s32 0, %v167
    %v169 = vrot.slane %v157, %v168
    %v170 = vmul.f32 %v70, %v169
    %v171 = vadd.f32 %v164, %v170
    %v172 = vlaneseq
    %v173 = vshrl.u32 %v172, 7
    %v174 = vsub.s32 1, %v173
    %v175 = vrot.slane %v157, %v174
    %v176 = vmul.f32 %v80, %v175
    %v177 = vadd.f32 %v171, %v176
    %v178 = vlaneseq
    %v179 = vshrl.u32 %v178, 7
    %v180 = vsub.s32 2, %v179
    %v181 = vrot.slane %v157, %v180
    %v182 = vmul.f32 %v90, %v181
    %v183 = vadd.f32 %v177, %v182
    %v184 = vlaneseq
    %v185 = vshrl.u32 %v184, 7
    %v186 = vsub.s32 3, %v185
    %v187 = vrot.slane %v157, %v186
    %v188 = vmul.f32 %v100, %v187
    %v189 = vadd.f32 %v183, %v188
    %v190 = vlaneseq
    %v191 = vshrl.u32 %v190, 7
    %v192 = vsub.s32 4, %v191
    %v193 = vrot.slane %v157, %v192
    %v194 = vmul.f32 %v110, %v193
    %v195 = vadd.f32 %v189, %v194
    %v196 = vlaneseq
    %v197 = vshrl.u32 %v196, 7
    %v198 = vsub.s32 5, %v197
    %v199 = vrot.slane %v157, %v198
    %v200 = vmul.f32 %v120, %v199
    %v201 = vadd.f32 %v195, %v200
    %v202 = vlaneseq
    %v203 = vshrl.u32 %v202, 7
    %v204 = vsub.s32 6, %v203
    %v205 = vrot.slane %v157, %v204
    %v206 = vmul.f32 %v130, %v205
    %v207 = vadd.f32 %v201, %v206
    %v208 = vlaneseq
    %v209 = vshrl.u32 %v208, 7
    %v210 = vsub.s32 7, %v209
    %v211 = vrot.slane %v157, %v210
    %v212 = vmul.f32 %v140, %v211
    %v213 = vadd.f32 %v207, %v212
    %v214 = vmax.f32 %v213, 0.0
    %v216 = vlaneseq
    %v217 = vshrl.u32 %v216, 7
    %v218 = vsub.s32 0, %v217
    %v219 = vrot.slane %v159, %v218
    %v221 = vmul.f32 %v214, %v219
    %v222 = vadd.f32 %v156, %v221
    %v223 = vld [vmem:[#allocation5 + $0x10] sm:$0xff]
    %v224 = vld [vmem:[%s2 + $0x2] sm:$0x1]
    %v225 = vld [vmem:[#allocation7 + $0x2] sm:$0x1]
    %v227 = vlaneseq
    %v228 = vshrl.u32 %v227, 7
    %v229 = vsub.s32 0, %v228
    %v230 = vrot.slane %v224, %v229
    %v232 = vlaneseq
    %v233 = vshrl.u32 %v232, 7
    %v234 = vsub.s32 0, %v233
    %v235 = vrot.slane %v223, %v234
    %v236 = vmul.f32 %v70, %v235
    %v237 = vadd.f32 %v230, %v236
    %v238 = vlaneseq
    %v239 = vshrl.u32 %v238, 7
    %v240 = vsub.s32 1, %v239
    %v241 = vrot.slane %v223, %v240
    %v242 = vmul.f32 %v80, %v241
    %v243 = vadd.f32 %v237, %v242
    %v244 = vlaneseq
    %v245 = vshrl.u32 %v244, 7
    %v246 = vsub.s32 2, %v245
    %v247 = vrot.slane %v223, %v246
    %v248 = vmul.f32 %v90, %v247
    %v249 = vadd.f32 %v243, %v248
    %v250 = vlaneseq
    %v251 = vshrl.u32 %v250, 7
    %v252 = vsub.s32 3, %v251
    %v253 = vrot.slane %v223, %v252
    %v254 = vmul.f32 %v100, %v253
    %v255 = vadd.f32 %v249, %v254
    %v256 = vlaneseq
    %v257 = vshrl.u32 %v256, 7
    %v258 = vsub.s32 4, %v257
    %v259 = vrot.slane %v223, %v258
    %v260 = vmul.f32 %v110, %v259
    %v261 = vadd.f32 %v255, %v260
    %v262 = vlaneseq
    %v263 = vshrl.u32 %v262, 7
    %v264 = vsub.s32 5, %v263
    %v265 = vrot.slane %v223, %v264
    %v266 = vmul.f32 %v120, %v265
    %v267 = vadd.f32 %v261, %v266
    %v268 = vlaneseq
    %v269 = vshrl.u32 %v268, 7
    %v270 = vsub.s32 6, %v269
    %v271 = vrot.slane %v223, %v270
    %v272 = vmul.f32 %v130, %v271
    %v273 = vadd.f32 %v267, %v272
    %v274 = vlaneseq
    %v275 = vshrl.u32 %v274, 7
    %v276 = vsub.s32 7, %v275
    %v277 = vrot.slane %v223, %v276
    %v278 = vmul.f32 %v140, %v277
    %v279 = vadd.f32 %v273, %v278
    %v280 = vmax.f32 %v279, 0.0
    %v282 = vlaneseq
    %v283 = vshrl.u32 %v282, 7
    %v284 = vsub.s32 0, %v283
    %v285 = vrot.slane %v225, %v284
    %v287 = vmul.f32 %v280, %v285
    %v288 = vadd.f32 %v222, %v287
    %v289 = vld [vmem:[#allocation5 + $0x18] sm:$0xff]
    %v290 = vld [vmem:[%s2 + $0x3] sm:$0x1]
    %v291 = vld [vmem:[#allocation7 + $0x3] sm:$0x1]
    %v293 = vlaneseq
    %v294 = vshrl.u32 %v293, 7
    %v295 = vsub.s32 0, %v294
    %v296 = vrot.slane %v290, %v295
    %v298 = vlaneseq
    %v299 = vshrl.u32 %v298, 7
    %v300 = vsub.s32 0, %v299
    %v301 = vrot.slane %v289, %v300
    %v302 = vmul.f32 %v70, %v301
    %v303 = vadd.f32 %v296, %v302
    %v304 = vlaneseq
    %v305 = vshrl.u32 %v304, 7
    %v306 = vsub.s32 1, %v305
    %v307 = vrot.slane %v289, %v306
    %v308 = vmul.f32 %v80, %v307
    %v309 = vadd.f32 %v303, %v308
    %v310 = vlaneseq
    %v311 = vshrl.u32 %v310, 7
    %v312 = vsub.s32 2, %v311
    %v313 = vrot.slane %v289, %v312
    %v314 = vmul.f32 %v90, %v313
    %v315 = vadd.f32 %v309, %v314
    %v316 = vlaneseq
    %v317 = vshrl.u32 %v316, 7
    %v318 = vsub.s32 3, %v317
    %v319 = vrot.slane %v289, %v318
    %v320 = vmul.f32 %v100, %v319
    %v321 = vadd.f32 %v315, %v320
    %v322 = vlaneseq
    %v323 = vshrl.u32 %v322, 7
    %v324 = vsub.s32 4, %v323
    %v325 = vrot.slane %v289, %v324
    %v326 = vmul.f32 %v110, %v325
    %v327 = vadd.f32 %v321, %v326
    %v328 = vlaneseq
    %v329 = vshrl.u32 %v328, 7
    %v330 = vsub.s32 5, %v329
    %v331 = vrot.slane %v289, %v330
    %v332 = vmul.f32 %v120, %v331
    %v333 = vadd.f32 %v327, %v332
    %v334 = vlaneseq
    %v335 = vshrl.u32 %v334, 7
    %v336 = vsub.s32 6, %v335
    %v337 = vrot.slane %v289, %v336
    %v338 = vmul.f32 %v130, %v337
    %v339 = vadd.f32 %v333, %v338
    %v340 = vlaneseq
    %v341 = vshrl.u32 %v340, 7
    %v342 = vsub.s32 7, %v341
    %v343 = vrot.slane %v289, %v342
    %v344 = vmul.f32 %v140, %v343
    %v345 = vadd.f32 %v339, %v344
    %v346 = vmax.f32 %v345, 0.0
    %v348 = vlaneseq
    %v349 = vshrl.u32 %v348, 7
    %v350 = vsub.s32 0, %v349
    %v351 = vrot.slane %v291, %v350
    %v353 = vmul.f32 %v346, %v351
    %v354 = vadd.f32 %v288, %v353
    %355 = vadd.xlane.f32.xlu0 %v354
    %v356 = vpop.xlane.xlu0 %355
    %v357 = vstv %s56
    %v358 = vadd.f32 %v356, %v357
    %vm359 = vcmask 7168
    %360 = vst.msk [vmem:[%s5] sm:$0xff] %vm359, %v358
    // Predicated region
    $region34: #{tpu_custom_call.1} parent=1 // pred_check
      _
    $region35: #{tpu_custom_call.1} parent=1 // pred_check_branch
      %362 = sbr.rel (0) target = $region37
    $region36: #{tpu_custom_call.1} parent=1 // pred_region
      _
    $region37: #{tpu_custom_call.1} parent=1 // pred_fallthru
      _
    // Predicated region
    $region38: #{tpu_custom_call.1} parent=1 // pred_check
      _
    $region39: #{tpu_custom_call.1} parent=1 // pred_check_branch
      %364 = sbr.rel (0) target = $region41
    $region40: #{tpu_custom_call.1} parent=1 // pred_region
      _
    $region41: #{tpu_custom_call.1} parent=1 // pred_fallthru
      _
    %365 = vsyncpa [#allocation4], 1
    %366 = vsyncpa [#allocation6], 1

</llo_original>
